<compile_context>
chip_gen: v7x
topology: tpu7x:2x2x1
jax: 0.10.0
libtpu: 0.0.40
codegen_flags: <defaults>
</compile_context>

<pallas_src>
import itertools as it
import math
from functools import partial
from typing import NamedTuple, Tuple

import jax
import jax.numpy as jnp
import numpy as np
from jax.experimental import pallas as pl
from jax.experimental.pallas import tpu as pltpu

LANE = 128               # vreg lane width
SUBLANE = 8              # f32 sublane count
_MAX_TILE_B = 1024       # large tiles amortize the ~0.35us/grid-step overhead
_MIN_PARALLEL_BATCH = 256  # below this a single tile wins; above, >=2 tiles (v7x 2 TCs)


def compute_action_list(dim, low, high, step):
    """Mirror of NN.compute_action_list (determines the output width)."""
    n = int(np.ceil((high - low) / step))
    _list_1d = np.linspace(low, high, n)
    return list(it.combinations_with_replacement(_list_1d, dim))


def _round_up(x, m):
    return (x + m - 1) // m * m


def init_params(key, dimentions, n_actions):
    """Xavier-uniform weights, zero biases — same layer structure as the torch
    module (first Linear has NO ReLU; dimentions[-1] is unused, as in the
    reference code).  Weights stored transposed: (in_features, out_features)."""
    in_outs = [(dimentions[0], dimentions[1])]
    relu_flags = [False]
    for n_in, n_out in zip(dimentions[1:-2], dimentions[2:-1]):
        in_outs.append((n_in, n_out))
        relu_flags.append(True)
    in_outs.append((dimentions[-2], n_actions))
    relu_flags.append(False)

    params = []
    for (fan_in, fan_out) in in_outs:
        key, sub = jax.random.split(key)
        bound = math.sqrt(6.0 / (fan_in + fan_out))
        w = jax.random.uniform(
            sub, (fan_in, fan_out), dtype=jnp.float32, minval=-bound, maxval=bound
        )
        b = jnp.zeros((1, fan_out), dtype=jnp.float32)
        params.append((w, b))
    return params, relu_flags


def fold_affine_layers(params, relu_flags):
    """Fuse consecutive Linear layers with no nonlinearity between them:
    (x @ W0 + b0) @ W1 + b1 == x @ (W0 @ W1) + (b0 @ W1 + b1)."""
    fused_params, fused_relu = [], []
    cur_w, cur_b = params[0]
    cur_relu = relu_flags[0]
    for (w, b), r in zip(params[1:], relu_flags[1:]):
        if not cur_relu:
            cur_w = cur_w @ w
            cur_b = cur_b @ w + b
            cur_relu = r
        else:
            fused_params.append((cur_w, cur_b))
            fused_relu.append(cur_relu)
            cur_w, cur_b, cur_relu = w, b, r
    fused_params.append((cur_w, cur_b))
    fused_relu.append(cur_relu)
    return fused_params, fused_relu


class MLPMeta(NamedTuple):
    """Static (hashable) kernel configuration; jit retraces only on shape change."""
    relu_flags: Tuple[bool, ...]
    bias_offsets: Tuple[int, ...]
    bias_widths: Tuple[int, ...]
    logical_dims: Tuple[Tuple[int, int], ...]   # per-layer (K, N) before padding
    in_dim: int
    k0: int            # first-layer contraction width as stored in HBM
    out_dim: int
    out_pad: int
    matmul_dtype: type  # jnp.float32 / jnp.bfloat16 (hashable type objects)


def prepare_params(params, relu_flags, *, matmul_dtype=jnp.float32):
    """ONE-TIME parameter preparation (hoisted out of the per-call path):
    folds activation-free consecutive Linears, pads + casts the weights, packs
    all biases into a single (1, sum_out_pad) buffer.  Returns
    (weights_tuple, packed_bias, meta)."""
    fparams, frelu = fold_affine_layers(params, relu_flags)

    in_dim = fparams[0][0].shape[0]
    out_dim = fparams[-1][0].shape[1]

    # First-layer K: keep it tiny (no 128-lane inflation of the x stream); just
    # align it to the MXU operand's sublane packing (8 for f32, 16 for bf16).
    k_align = 16 if np.dtype(matmul_dtype).itemsize == 2 else SUBLANE
    k0 = _round_up(in_dim, k_align)

    out_pads = [_round_up(w.shape[1], LANE) for (w, _) in fparams]
    in_pads = [k0] + out_pads[:-1]

    weights, bias_chunks = [], []
    bias_offsets, bias_widths, logical_dims = [], [], []
    off = 0
    for (w, b), ip, op in zip(fparams, in_pads, out_pads):
        wp = jnp.pad(w, ((0, ip - w.shape[0]), (0, op - w.shape[1])))
        weights.append(wp.astype(matmul_dtype))
        bias_chunks.append(jnp.pad(b, ((0, 0), (0, op - b.shape[1]))))
        bias_offsets.append(off)
        bias_widths.append(op)
        logical_dims.append((w.shape[0], w.shape[1]))
        off += op
    b_all = jnp.concatenate(bias_chunks, axis=1)   # (1, sum_out_pad) f32

    meta = MLPMeta(
        relu_flags=tuple(frelu),
        bias_offsets=tuple(bias_offsets),
        bias_widths=tuple(bias_widths),
        logical_dims=tuple(logical_dims),
        in_dim=in_dim,
        k0=k0,
        out_dim=out_dim,
        out_pad=out_pads[-1],
        matmul_dtype=matmul_dtype,
    )
    return tuple(weights), b_all, meta


def _choose_batch_tiling(batch):
    """Batch padding/tiling policy:
      * pad batch only to a sublane multiple (no fixed-128 over-padding),
      * single tile for small batches (per-grid-step overhead dominates),
      * otherwise >=2 parallel tiles (v7x has 2 TensorCores), capped at 1024
        rows and sized so padded_batch - batch waste stays < one sublane/tile."""
    pb = _round_up(max(int(batch), 1), SUBLANE)
    if pb < _MIN_PARALLEL_BATCH:
        return pb, pb
    n_tiles = max(2, -(-pb // _MAX_TILE_B))
    tile = _round_up(-(-pb // n_tiles), SUBLANE)
    return tile * n_tiles, tile


def _make_mlp_kernel(num_layers, relu_flags, bias_offsets, bias_widths, matmul_dtype):
    """Whole MLP hot path: chained (MXU matmul -> f32 bias add -> ReLU)."""

    def kernel(*refs):
        x_ref = refs[0]
        w_refs = refs[1:1 + num_layers]
        b_ref = refs[1 + num_layers]        # packed (1, sum_out_pad) f32 biases
        out_ref = refs[2 + num_layers]

        h = x_ref[...]                      # (tile_b, k0) in matmul_dtype
        for i in range(num_layers):
            acc = jnp.dot(h.astype(matmul_dtype), w_refs[i][...],
                          preferred_element_type=jnp.float32)
            off, width = bias_offsets[i], bias_widths[i]
            h = acc + b_ref[:, off:off + width]   # static 128-aligned slice; f32 VPU
            if relu_flags[i]:
                h = jnp.maximum(h, 0.0)
        out_ref[...] = h.astype(out_ref.dtype)

    return kernel


@partial(jax.jit, static_argnames=("meta",))
def _mlp_forward_impl(x, weights, bias, meta):
    batch, feat = x.shape
    assert feat == meta.in_dim, (feat, meta.in_dim)
    num_layers = len(weights)

    padded_batch, tile_b = _choose_batch_tiling(batch)

    # x keeps its logical feature width in HBM (k0 = 8 for f32 / 16 for bf16):
    # no 16x lane inflation of the dominant activation stream.
    x_prep = jnp.pad(x.astype(meta.matmul_dtype),
                     ((0, padded_batch - batch), (0, meta.k0 - feat)))

    kernel = _make_mlp_kernel(num_layers, meta.relu_flags, meta.bias_offsets,
                              meta.bias_widths, meta.matmul_dtype)

    in_specs = [pl.BlockSpec((tile_b, meta.k0), lambda i: (i, 0))]
    for w in weights:
        # Constant index_map -> weight block stays VMEM-resident across batch
        # tiles (no re-DMA).  TODO(synk): pipeline_mode=pl.Buffered(1) would
        # drop the unused second buffer (~100 KiB today); left at the default
        # double-buffering to keep the lowering path maximally portable.
        in_specs.append(pl.BlockSpec(w.shape, lambda i: (0, 0)))
    in_specs.append(pl.BlockSpec(bias.shape, lambda i: (0, 0)))
    out_specs = pl.BlockSpec((tile_b, meta.out_pad), lambda i: (i, 0))

    # Logical (unpadded) FLOPs: this kernel is memory/latency-bound and padded
    # FLOPs would overstate compute ~50x to XLA's scheduler.  Bytes stay padded.
    flops = 2 * batch * sum(k * n for k, n in meta.logical_dims)
    bytes_accessed = (
        x_prep.size * x_prep.dtype.itemsize
        + padded_batch * meta.out_pad * 4
        + sum(w.size * w.dtype.itemsize for w in weights)
        + bias.size * bias.dtype.itemsize
    )

    out_padded = pl.pallas_call(
        kernel,
        out_shape=jax.ShapeDtypeStruct((padded_batch, meta.out_pad), jnp.float32),
        grid_spec=pltpu.PrefetchScalarGridSpec(
            num_scalar_prefetch=0,
            grid=(padded_batch // tile_b,),
            in_specs=in_specs,
            out_specs=out_specs,
        ),
        compiler_params=pltpu.CompilerParams(
            dimension_semantics=("parallel",),
        ),
        cost_estimate=pl.CostEstimate(
            flops=flops, transcendentals=0, bytes_accessed=bytes_accessed),
    )(x_prep, *weights, bias)

    # Strip padding back to the logical output shape.
    return out_padded[:batch, :meta.out_dim]


def mlp_forward(x, prepared):
    """Per-call hot path: a single jitted (pad -> pallas_call -> slice)."""
    weights, bias, meta = prepared
    return _mlp_forward_impl(x, weights, bias, meta)


def mlp_forward_ref(x, params, relu_flags):
    """Pure-JAX reference (unfused, unpadded) — the torch module's semantics."""
    h = x
    for (w, b), relu in zip(params, relu_flags):
        h = h @ w + b
        if relu:
            h = jnp.maximum(h, 0.0)
    return h


if __name__ == "__main__":
    # dimentions[-1] is intentionally unused (matches the torch module).
    dimentions = [8, 32, 32, 16]
    action_list = compute_action_list(2, -0.5, 0.5, 0.25)
    n_actions = len(action_list)  # == 10

    key = jax.random.PRNGKey(0)
    key, xkey, xkey2 = jax.random.split(key, 3)
    params, relu_flags = init_params(key, dimentions, n_actions)

    batch = 2
    x = jax.random.normal(xkey, (batch, dimentions[0]), dtype=jnp.float32)
    ref = mlp_forward_ref(x, params, relu_flags)

    # One-time parameter preparation (hoisted out of the per-call path).
    prepared_f32 = prepare_params(params, relu_flags, matmul_dtype=jnp.float32)

    out = jax.block_until_ready(mlp_forward(x, prepared_f32))
    np.testing.assert_allclose(np.asarray(out), np.asarray(ref), rtol=1e-5, atol=1e-5)
    assert out.shape == (batch, n_actions)

    # Larger batch: exercises the >=2-tile parallel grid (both v7x TensorCores)
    # and the divisor-friendly batch padding (300 -> 304 rows, 2 tiles of 152).
    big_batch = 300
    xb = jax.random.normal(xkey2, (big_batch, dimentions[0]), dtype=jnp.float32)
    refb = mlp_forward_ref(xb, params, relu_flags)
    outb = jax.block_until_ready(mlp_forward(xb, prepared_f32))
    np.testing.assert_allclose(np.asarray(outb), np.asarray(refb),
                               rtol=1e-5, atol=1e-5)

    # bf16 MXU operands + bf16 activation stream at the kernel boundary;
    # accumulation, bias-add and ReLU remain f32 inside the kernel.
    prepared_bf16 = prepare_params(params, relu_flags, matmul_dtype=jnp.bfloat16)
    out_bf16 = jax.block_until_ready(mlp_forward(x, prepared_bf16))
    np.testing.assert_allclose(np.asarray(out_bf16), np.asarray(ref),
                               rtol=5e-2, atol=5e-2)

    print("KERNEL_OK")
</pallas_src>

<mosaic_0001>
module attributes {stable_mosaic.version = 11 : i64} {
  func.func @kernel(%arg0: i32, %arg1: memref<8x8xf32, #tpu.memory_space<vmem>>, %arg2: memref<8x128xf32, #tpu.memory_space<vmem>>, %arg3: memref<128x128xf32, #tpu.memory_space<vmem>>, %arg4: memref<1x256xf32, #tpu.memory_space<vmem>>, %arg5: memref<8x128xf32, #tpu.memory_space<vmem>>) attributes {dimension_semantics = [#tpu.dimension_semantics<parallel>], iteration_bounds = array<i64: 1>, scalar_prefetch = 0 : i64, scratch_operands = 0 : i64, tpu.core_type = #tpu.core_type<tc>, window_params = [{transform_indices = @transform_0, window_bounds = array<i64: 8, 8>}, {pipeline_mode = #tpu.pipeline_mode<synchronous>, transform_indices = @transform_1, window_bounds = array<i64: 8, 128>}, {pipeline_mode = #tpu.pipeline_mode<synchronous>, transform_indices = @transform_2, window_bounds = array<i64: 128, 128>}, {pipeline_mode = #tpu.pipeline_mode<synchronous>, transform_indices = @transform_3, window_bounds = array<i64: 1, 256>}, {transform_indices = @transform_4, window_bounds = array<i64: 8, 128>}]} {
    %c0 = arith.constant 0 : index
    %c0_0 = arith.constant 0 : index
    %0 = vector.load %arg1[%c0, %c0_0] : memref<8x8xf32, #tpu.memory_space<vmem>>, vector<8x8xf32>
    %c0_1 = arith.constant 0 : index
    %c0_2 = arith.constant 0 : index
    %1 = vector.load %arg2[%c0_1, %c0_2] : memref<8x128xf32, #tpu.memory_space<vmem>>, vector<8x128xf32>
    %cst = arith.constant dense<0.000000e+00> : vector<8x128xf32>
    %2 = tpu.matmul %0, %1, %cst {dimension_numbers = #tpu.dot_dimension_numbers<[1], [0], [0], [1], [0, 0, 1, 1], [], []>} : vector<8x8xf32>, vector<8x128xf32>, vector<8x128xf32> -> vector<8x128xf32>
    %c0_3 = arith.constant 0 : index
    %c0_4 = arith.constant 0 : index
    %3 = vector.load %arg4[%c0_3, %c0_4] : memref<1x256xf32, #tpu.memory_space<vmem>>, vector<1x128xf32>
    %4 = vector.broadcast %3 : vector<1x128xf32> to vector<8x128xf32>
    %5 = arith.addf %2, %4 : vector<8x128xf32>
    %cst_5 = arith.constant 0.000000e+00 : f32
    %6 = vector.broadcast %cst_5 : f32 to vector<8x128xf32>
    %7 = arith.maximumf %5, %6 : vector<8x128xf32>
    %c0_6 = arith.constant 0 : index
    %c0_7 = arith.constant 0 : index
    %8 = vector.load %arg3[%c0_6, %c0_7] : memref<128x128xf32, #tpu.memory_space<vmem>>, vector<128x128xf32>
    %cst_8 = arith.constant dense<0.000000e+00> : vector<8x128xf32>
    %9 = tpu.matmul %7, %8, %cst_8 {dimension_numbers = #tpu.dot_dimension_numbers<[1], [0], [0], [1], [0, 0, 1, 1], [], []>} : vector<8x128xf32>, vector<128x128xf32>, vector<8x128xf32> -> vector<8x128xf32>
    %c0_9 = arith.constant 0 : index
    %c128 = arith.constant 128 : index
    %10 = vector.load %arg4[%c0_9, %c128] : memref<1x256xf32, #tpu.memory_space<vmem>>, vector<1x128xf32>
    %11 = vector.broadcast %10 : vector<1x128xf32> to vector<8x128xf32>
    %12 = arith.addf %9, %11 : vector<8x128xf32>
    %c0_10 = arith.constant 0 : index
    %c0_11 = arith.constant 0 : index
    %13 = vector.load %arg5[%c0_10, %c0_11] : memref<8x128xf32, #tpu.memory_space<vmem>>, vector<8x128xf32>
    tpu.vector_store %arg5[%c0_10, %c0_11], %12 {strides = array<i32>} : memref<8x128xf32, #tpu.memory_space<vmem>>, vector<8x128xf32>,
    return
  }
  func.func @transform_0(%arg0: i32) -> (i32, i32) {
    %c0_i32 = arith.constant 0 : i32
    %c0_i32_0 = arith.constant 0 : i32
    return %arg0, %c0_i32 : i32, i32
  }
  func.func @transform_1(%arg0: i32) -> (i32, i32) {
    %c0_i32 = arith.constant 0 : i32
    %c0_i32_0 = arith.constant 0 : i32
    %c0_i32_1 = arith.constant 0 : i32
    return %c0_i32, %c0_i32_0 : i32, i32
  }
  func.func @transform_2(%arg0: i32) -> (i32, i32) {
    %c0_i32 = arith.constant 0 : i32
    %c0_i32_0 = arith.constant 0 : i32
    %c0_i32_1 = arith.constant 0 : i32
    return %c0_i32, %c0_i32_0 : i32, i32
  }
  func.func @transform_3(%arg0: i32) -> (i32, i32) {
    %c0_i32 = arith.constant 0 : i32
    %c0_i32_0 = arith.constant 0 : i32
    %c0_i32_1 = arith.constant 0 : i32
    return %c0_i32, %c0_i32_0 : i32, i32
  }
  func.func @transform_4(%arg0: i32) -> (i32, i32) {
    %c0_i32 = arith.constant 0 : i32
    %c0_i32_0 = arith.constant 0 : i32
    return %arg0, %c0_i32 : i32, i32
  }
}

</mosaic_0001>

<llo_original>
// kernel: _mlp_forward_impl.1
$region0: #{_mlp_forward_impl.1}
  #allocation0 [shape = 'u32[]', space=smem, size = 0x4, offset = 0x4, fixed_abs, tag = 'smem constant byte address 0x4 - core index']
  #allocation1 [shape = 'u32[144,128]{1,0:T(1,128)}', space=vmem, size = 0x12000, scoped, tag = 'internal scratch']
  %s0 = inlined_call_operand.vmem [shape: f32[8,8], index: 0, kind: input, shape index: {}]
  %s1 = inlined_call_operand.vmem [shape: f32[8,128], index: 1, kind: input, shape index: {}]
  %s2 = inlined_call_operand.hbm [shape: f32[128,128], index: 2, kind: input, shape index: {}]
  %s3 = inlined_call_operand.vmem [shape: f32[1,256], index: 3, kind: input, shape index: {}]
  %s4 = inlined_call_operand.vmem [shape: f32[8,128], index: 4, kind: output, shape index: {}]
  %s5 = sld [smem:[#allocation0]]
  $region30: #{_mlp_forward_impl.1} parent=0
    _
  %s7 = ssub.s32 1, %s5
  %s8 = scalar_select 0, %s7, %s5
  $region1: #{_mlp_forward_impl.1} parent=0
    #allocation2 [shape = 'u8[65536]{0}', space=vmem, size = 0x10000, scoped, tag = 'input window, operand 2, single buffered']
    #allocation3 [shape = 's32[1]{0}', space=sflag, size = 0x4, scoped, tag = 'scoped memory for _mlp_forward_impl.1']
    %9 = vsyncpa [#allocation3], 0
    // Predicated region
    $region2: #{_mlp_forward_impl.1} parent=1 // pred_check
      _
    $region3: #{_mlp_forward_impl.1} parent=1 // pred_check_branch
      %11 = sbr.rel (0) target = $region5
    $region4: #{_mlp_forward_impl.1} parent=1 // pred_region
      _
    $region5: #{_mlp_forward_impl.1} parent=1 // pred_fallthru
      _
    // Predicated region
    $region6: #{_mlp_forward_impl.1} parent=1 // pred_check
      _
    $region7: #{_mlp_forward_impl.1} parent=1 // pred_check_branch
      %13 = sbr.rel (0) target = $region9
    $region8: #{_mlp_forward_impl.1} parent=1 // pred_region
      _
    $region9: #{_mlp_forward_impl.1} parent=1 // pred_fallthru
      _
    // Predicated region
    $region10: #{_mlp_forward_impl.1} parent=1 // pred_check
      _
    $region11: #{_mlp_forward_impl.1} parent=1 // pred_check_branch
      %15 = sbr.rel (0) target = $region13
    $region12: #{_mlp_forward_impl.1} parent=1 // pred_region
      %s17 = ssub.s32 2048, 2048
      %18 = vsyncadd [#allocation3], %s17
      %s19 = sshll.u32 [#allocation2], 4
      %s20 = int_to_ptr.vmem [resolvable:$true] %s19
      %25 = dma.hbm_to_vmem [thread:$0]  %s2, 2048, %s20, [#allocation3], 128, 128, 8
    $region13: #{_mlp_forward_impl.1} parent=1 // pred_fallthru
      _
    // Predicated region
    $region14: #{_mlp_forward_impl.1} parent=1 // pred_check
      _
    $region15: #{_mlp_forward_impl.1} parent=1 // pred_check_branch
      %27 = sbr.rel (0) target = $region17
    $region16: #{_mlp_forward_impl.1} parent=1 // pred_region
      _
    $region17: #{_mlp_forward_impl.1} parent=1 // pred_fallthru
      _
    // Predicated region
    $region18: #{_mlp_forward_impl.1} parent=1 // pred_check
      _
    $region19: #{_mlp_forward_impl.1} parent=1 // pred_check_branch
      %29 = sbr.rel (0) target = $region21
    $region20: #{_mlp_forward_impl.1} parent=1 // pred_region
      %30 = dma.done [#allocation3], 2048
    $region21: #{_mlp_forward_impl.1} parent=1 // pred_fallthru
      _
    %v31 = vld [vmem:[%s0] sm:$0xff]
    %v32 = vld [vmem:[%s1] sm:$0xff]
    %v33 = vld [vmem:[%s3] sm:$0x1]
    %v35 = vlaneseq
    %v36 = vshrl.u32 %v35, 7
    %v37 = vsub.s32 0, %v36
    %v38 = vrot.slane %v33, %v37
    %vm40 = vcmask 64512
    %v42 = vsel %vm40, %v31, 0
    %44 = vmatprep.subr.mxu0 0.0
    %45 = vmatpush1.msra.mxu0 %v32
    %46 = vmatprep.subr.mxu0 0.0
    %47 = vmatpush1.msra.mxu0 0.0
    %48 = vmatprep.subr.mxu0 0.0
    %49 = vmatpush1.msra.mxu0 0.0
    %50 = vmatprep.subr.mxu0 0.0
    %51 = vmatpush1.msra.mxu0 0.0
    %52 = vmatprep.subr.mxu0 0.0
    %53 = vmatpush1.msra.mxu0 0.0
    %54 = vmatprep.subr.mxu0 0.0
    %55 = vmatpush1.msra.mxu0 0.0
    %56 = vmatprep.subr.mxu0 0.0
    %57 = vmatpush1.msra.mxu0 0.0
    %58 = vmatprep.subr.mxu0 0.0
    %59 = vmatpush1.msra.mxu0 0.0
    %60 = vmatprep.subr.mxu0 0.0
    %61 = vmatpush1.msra.mxu0 0.0
    %62 = vmatprep.subr.mxu0 0.0
    %63 = vmatpush1.msra.mxu0 0.0
    %64 = vmatprep.subr.mxu0 0.0
    %65 = vmatpush1.msra.mxu0 0.0
    %66 = vmatprep.subr.mxu0 0.0
    %67 = vmatpush1.msra.mxu0 0.0
    %68 = vmatprep.subr.mxu0 0.0
    %69 = vmatpush1.msra.mxu0 0.0
    %70 = vmatprep.subr.mxu0 0.0
    %71 = vmatpush1.msra.mxu0 0.0
    %72 = vmatprep.subr.mxu0 0.0
    %73 = vmatpush1.msra.mxu0 0.0
    %74 = vmatprep.subr.mxu0 0.0
    %75 = vmatpush1.msra.mxu0 0.0
    %76 = vmatprep.subr.mxu0 0.0
    %77 = vmatpush1.msra.mxu0 0.0
    %78 = vmatprep.subr.mxu0 0.0
    %79 = vmatpush1.msra.mxu0 0.0
    %80 = vmatprep.subr.mxu0 0.0
    %81 = vmatpush1.msra.mxu0 0.0
    %82 = vmatprep.subr.mxu0 0.0
    %83 = vmatpush1.msra.mxu0 0.0
    %84 = vmatprep.subr.mxu0 0.0
    %85 = vmatpush1.msra.mxu0 0.0
    %86 = vmatprep.subr.mxu0 0.0
    %87 = vmatpush1.msra.mxu0 0.0
    %88 = vmatprep.subr.mxu0 0.0
    %89 = vmatpush1.msra.mxu0 0.0
    %90 = vmatprep.subr.mxu0 0.0
    %91 = vmatpush1.msra.mxu0 0.0
    %92 = vmatprep.subr.mxu0 0.0
    %93 = vmatpush1.msra.mxu0 0.0
    %94 = vmatprep.subr.mxu0 0.0
    %95 = vmatpush1.msra.mxu0 0.0
    %96 = vmatprep.subr.mxu0 0.0
    %97 = vmatpush1.msra.mxu0 0.0
    %98 = vmatprep.subr.mxu0 0.0
    %99 = vmatpush1.msra.mxu0 0.0
    %100 = vmatprep.subr.mxu0 0.0
    %101 = vmatpush1.msra.mxu0 0.0
    %102 = vmatprep.subr.mxu0 0.0
    %103 = vmatpush1.msra.mxu0 0.0
    %104 = vmatprep.subr.mxu0 0.0
    %105 = vmatpush1.msra.mxu0 0.0
    %106 = vmatprep.subr.mxu0 0.0
    %107 = vmatpush1.msra.mxu0 0.0
    %108 = vmatprep.mubr.f32.mxu0 0.0
    %109 = vmatmul.mubr.f32.gmra.mrb[0].mxu0 %v42
    %v110 = vpop.f32.mrb[0].mxu0
    %v111 = vadd.f32 %v38, %v110
    %v112 = vpop.f32.mrb[0].mxu0
    %113 = vdwg.mxu0
    %v114 = vmax.f32 %v111, 0.0
    %v115 = vld [vmem:[#allocation2] sm:$0xff]
    %v116 = vld [vmem:[#allocation2 + $0x8] sm:$0xff]
    %v117 = vld [vmem:[#allocation2 + $0x10] sm:$0xff]
    %v118 = vld [vmem:[#allocation2 + $0x18] sm:$0xff]
    %v119 = vld [vmem:[#allocation2 + $0x20] sm:$0xff]
    %v120 = vld [vmem:[#allocation2 + $0x28] sm:$0xff]
    %v121 = vld [vmem:[#allocation2 + $0x30] sm:$0xff]
    %v122 = vld [vmem:[#allocation2 + $0x38] sm:$0xff]
    %v123 = vld [vmem:[#allocation2 + $0x40] sm:$0xff]
    %v124 = vld [vmem:[#allocation2 + $0x48] sm:$0xff]
    %v125 = vld [vmem:[#allocation2 + $0x50] sm:$0xff]
    %v126 = vld [vmem:[#allocation2 + $0x58] sm:$0xff]
    %v127 = vld [vmem:[#allocation2 + $0x60] sm:$0xff]
    %v128 = vld [vmem:[#allocation2 + $0x68] sm:$0xff]
    %v129 = vld [vmem:[#allocation2 + $0x70] sm:$0xff]
    %v130 = vld [vmem:[#allocation2 + $0x78] sm:$0xff]
    %v131 = vld [vmem:[%s3 + $0x1] sm:$0x1]
    %v133 = vlaneseq
    %v134 = vshrl.u32 %v133, 7
    %v135 = vsub.s32 0, %v134
    %v136 = vrot.slane %v131, %v135
    %138 = vmatprep.subr.mxu0 0.0
    %139 = vmatpush1.msra.mxu0 %v115
    %140 = vmatprep.subr.mxu0 0.0
    %141 = vmatpush1.msra.mxu0 %v116
    %142 = vmatprep.subr.mxu0 0.0
    %143 = vmatpush1.msra.mxu0 %v117
    %144 = vmatprep.subr.mxu0 0.0
    %145 = vmatpush1.msra.mxu0 %v118
    %146 = vmatprep.subr.mxu0 0.0
    %147 = vmatpush1.msra.mxu0 %v119
    %148 = vmatprep.subr.mxu0 0.0
    %149 = vmatpush1.msra.mxu0 %v120
    %150 = vmatprep.subr.mxu0 0.0
    %151 = vmatpush1.msra.mxu0 %v121
    %152 = vmatprep.subr.mxu0 0.0
    %153 = vmatpush1.msra.mxu0 %v122
    %154 = vmatprep.subr.mxu0 0.0
    %155 = vmatpush1.msra.mxu0 %v123
    %156 = vmatprep.subr.mxu0 0.0
    %157 = vmatpush1.msra.mxu0 %v124
    %158 = vmatprep.subr.mxu0 0.0
    %159 = vmatpush1.msra.mxu0 %v125
    %160 = vmatprep.subr.mxu0 0.0
    %161 = vmatpush1.msra.mxu0 %v126
    %162 = vmatprep.subr.mxu0 0.0
    %163 = vmatpush1.msra.mxu0 %v127
    %164 = vmatprep.subr.mxu0 0.0
    %165 = vmatpush1.msra.mxu0 %v128
    %166 = vmatprep.subr.mxu0 0.0
    %167 = vmatpush1.msra.mxu0 %v129
    %168 = vmatprep.subr.mxu0 0.0
    %169 = vmatpush1.msra.mxu0 %v130
    %170 = vmatprep.subr.mxu0 0.0
    %171 = vmatpush1.msra.mxu0 0.0
    %172 = vmatprep.subr.mxu0 0.0
    %173 = vmatpush1.msra.mxu0 0.0
    %174 = vmatprep.subr.mxu0 0.0
    %175 = vmatpush1.msra.mxu0 0.0
    %176 = vmatprep.subr.mxu0 0.0
    %177 = vmatpush1.msra.mxu0 0.0
    %178 = vmatprep.subr.mxu0 0.0
    %179 = vmatpush1.msra.mxu0 0.0
    %180 = vmatprep.subr.mxu0 0.0
    %181 = vmatpush1.msra.mxu0 0.0
    %182 = vmatprep.subr.mxu0 0.0
    %183 = vmatpush1.msra.mxu0 0.0
    %184 = vmatprep.subr.mxu0 0.0
    %185 = vmatpush1.msra.mxu0 0.0
    %186 = vmatprep.subr.mxu0 0.0
    %187 = vmatpush1.msra.mxu0 0.0
    %188 = vmatprep.subr.mxu0 0.0
    %189 = vmatpush1.msra.mxu0 0.0
    %190 = vmatprep.subr.mxu0 0.0
    %191 = vmatpush1.msra.mxu0 0.0
    %192 = vmatprep.subr.mxu0 0.0
    %193 = vmatpush1.msra.mxu0 0.0
    %194 = vmatprep.subr.mxu0 0.0
    %195 = vmatpush1.msra.mxu0 0.0
    %196 = vmatprep.subr.mxu0 0.0
    %197 = vmatpush1.msra.mxu0 0.0
    %198 = vmatprep.subr.mxu0 0.0
    %199 = vmatpush1.msra.mxu0 0.0
    %200 = vmatprep.subr.mxu0 0.0
    %201 = vmatpush1.msra.mxu0 0.0
    %202 = vmatprep.mubr.f32.mxu0 0.0
    %203 = vmatmul.mubr.f32.gmra.mrb[0].mxu0 %v114
    %v204 = vpop.f32.mrb[0].mxu0
    %v205 = vadd.f32 %v136, %v204
    %v206 = vpop.f32.mrb[0].mxu0
    %207 = vdwg.mxu0
    %208 = vst [vmem:[%s4] sm:$0xff] %v205
    // Predicated region
    $region22: #{_mlp_forward_impl.1} parent=1 // pred_check
      _
    $region23: #{_mlp_forward_impl.1} parent=1 // pred_check_branch
      %210 = sbr.rel (0) target = $region25
    $region24: #{_mlp_forward_impl.1} parent=1 // pred_region
      _
    $region25: #{_mlp_forward_impl.1} parent=1 // pred_fallthru
      _
    // Predicated region
    $region26: #{_mlp_forward_impl.1} parent=1 // pred_check
      _
    $region27: #{_mlp_forward_impl.1} parent=1 // pred_check_branch
      %212 = sbr.rel (0) target = $region29
    $region28: #{_mlp_forward_impl.1} parent=1 // pred_region
      _
    $region29: #{_mlp_forward_impl.1} parent=1 // pred_fallthru
      _
    %213 = vsyncpa [#allocation3], 1

</llo_original>
